<compile_context>
chip_gen: v7x
topology: tpu7x:2x2x1
jax: 0.10.0
libtpu: 0.0.40
codegen_flags: <defaults>
</compile_context>

<pallas_src>
import functools

import jax
import jax.numpy as jnp
from jax.experimental import pallas as pl
from jax.experimental.pallas import tpu as pltpu


def _round_up(a, b):
    return (a + b - 1) // b * b


def _pick_divisor(h, prefs):
    for t in prefs:
        if t <= h and h % t == 0:
            return t
    return h


# ---------------------------------------------------------------------------
# Kernels
# ---------------------------------------------------------------------------
def _resblock_kernel_resident(x_ref, wt_ref, b_ref, o_ref):
    """Full (H, H) weight resident in VMEM; 1-D grid over row tiles."""
    x = x_ref[...]
    z = jnp.dot(x.astype(wt_ref.dtype), wt_ref[...],
                preferred_element_type=jnp.float32)
    z = z + b_ref[...].astype(jnp.float32)
    o_ref[...] = (x.astype(jnp.float32) + z * jax.nn.sigmoid(z)).astype(o_ref.dtype)


def _resblock_kernel_streamed(x_ref, wt_ref, b_ref, o_ref, acc_ref, *, tn, tk):
    """3-D grid (rows, cols, K), K last, f32 VMEM accumulator.

    x_ref is a (tm, H) row panel (block index (i, 0)): fetched once per row
    tile and sliced in-kernel for both the matmul k-chunk and the residual.
    """
    j = pl.program_id(1)
    k = pl.program_id(2)

    @pl.when(k == 0)
    def _():
        # Fold the bias into the accumulator init: one add per output tile.
        acc_ref[...] = jnp.broadcast_to(
            b_ref[...].astype(jnp.float32), acc_ref.shape)

    k_off = pl.multiple_of(k * tk, tk)
    x_chunk = x_ref[:, pl.ds(k_off, tk)]
    acc_ref[...] += jnp.dot(x_chunk.astype(wt_ref.dtype), wt_ref[...],
                            preferred_element_type=jnp.float32)

    @pl.when(k == pl.num_programs(2) - 1)
    def _():
        j_off = pl.multiple_of(j * tn, tn)
        xres = x_ref[:, pl.ds(j_off, tn)].astype(jnp.float32)
        z = acc_ref[...]
        o_ref[...] = (xres + z * jax.nn.sigmoid(z)).astype(o_ref.dtype)  # SiLU -> EUP


# ---------------------------------------------------------------------------
# Wrapper
# ---------------------------------------------------------------------------
def prepare_resblock_params(weight, bias, *, weight_dtype=jnp.bfloat16):
    """One-time param prep (checkpoint-load time, not the per-call hot path).

    PyTorch's (out, in) weight is transposed to (in, out) and cast to bf16 so
    the kernel streams half the HBM bytes and hits the single-pass bf16 MXU
    path; the bias stays f32 (it is added into the f32 accumulator).
    """
    wt = jnp.asarray(weight).T.astype(weight_dtype)
    b2 = jnp.asarray(bias).reshape(1, -1).astype(jnp.float32)
    return wt, b2


@functools.partial(jax.jit, static_argnames=("tm", "tn", "tk"))
def resblock(x, wt, b2, *, tm=None, tn=None, tk=None):
    """x: (M, H); wt: (H, H) pre-transposed to (in, out); b2: (1, H) f32."""
    M, H = x.shape
    assert wt.shape == (H, H) and b2.shape == (1, H)

    x_sz = x.dtype.itemsize
    w_sz = wt.dtype.itemsize
    b_sz = b2.dtype.itemsize

    V7X_SAFE_VMEM = 40 * 1024 * 1024   # stay well under v7x's 64 MiB physical

    # ---- plan selection -----------------------------------------------------
    # Weight-resident plan when the (double-buffered) full weight fits VMEM
    # comfortably (e.g. H <= 2048 in bf16) and the caller didn't force tiling.
    weight_vmem = 2 * H * H * w_sz
    resident = (weight_vmem <= 16 * 1024 * 1024
                and (tn is None or tn == H) and (tk is None or tk == H))
    auto_tm = tm is None

    Mp = _round_up(M, 8)

    if resident:
        tn = tk = H
        if auto_tm:
            tm = 512
    else:
        if tn is None:
            tn = _pick_divisor(H, (256, 128))
        if tk is None:
            tk = _pick_divisor(H, (2048, 1024, 512, 256, 128))
        if not (H % tn == 0 and H % tk == 0):
            raise ValueError(f"H={H} must be divisible by tn={tn} and tk={tk}")
        if not ((tn % 128 == 0 or tn == H) and (tk % 128 == 0 or tk == H)):
            raise ValueError("tn / tk must be multiples of 128 (or equal H)")
        if auto_tm:
            # Weight-reuse knob: >= ~650 rows keeps bf16 weights MXU-bound on
            # v6e; shrink against the v7x VMEM budget if the panels get big.
            tm = 768
            while tm > 256 and (2 * tm * H * x_sz + 2 * tm * tn * x_sz
                                + tm * tn * 4 + 2 * tk * tn * w_sz
                                ) > V7X_SAFE_VMEM:
                tm //= 2

    # ---- row tiling / padding (handles ragged batch*seq) --------------------
    tm = min(tm, Mp)
    if tm != Mp:
        tm = _round_up(tm, 8)
    if resident and auto_tm and Mp // tm < 2 and Mp >= 16:
        # Keep both v7x TensorCores fed: >= 2 blocks on the only parallel axis.
        tm = _round_up(-(-Mp // 2), 8)
    Mp = _round_up(Mp, tm)
    if Mp != M:
        x = jnp.pad(x, ((0, Mp - M), (0, 0)))

    n_row_tiles = Mp // tm

    # ---- VMEM budget / compiler params --------------------------------------
    if resident:
        footprint = (2 * tm * H * x_sz          # x row panel (double-buffered)
                     + 2 * tm * H * x_sz        # output panel
                     + 2 * H * H * w_sz         # resident weight
                     + 2 * H * b_sz)            # bias
    else:
        footprint = (2 * tm * H * x_sz          # x row panel
                     + 2 * tk * tn * w_sz       # weight tile
                     + 2 * tn * b_sz            # bias row
                     + 2 * tm * tn * x_sz       # output tile
                     + tm * tn * 4)             # f32 accumulator
    vmem_limit = int(min(max(int(footprint * 1.3) + (1 << 20), 32 << 20),
                         100 << 20))

    # ---- cost estimate (actual traffic, incl. per-row-tile weight re-reads) --
    weight_reads = 1 if resident else n_row_tiles
    cost = pl.CostEstimate(
        flops=2 * Mp * H * H,
        transcendentals=Mp * H,                         # one sigmoid / element
        bytes_accessed=(Mp * H * x_sz                   # x (one fetch / row tile)
                        + Mp * H * x_sz                 # output
                        + weight_reads * H * H * w_sz   # weight stream
                        + weight_reads * H * b_sz),     # bias
    )

    if resident:
        out = pl.pallas_call(
            _resblock_kernel_resident,
            out_shape=jax.ShapeDtypeStruct((Mp, H), x.dtype),
            grid_spec=pltpu.PrefetchScalarGridSpec(
                num_scalar_prefetch=0,
                grid=(n_row_tiles,),
                in_specs=[
                    pl.BlockSpec((tm, H), lambda i: (i, 0)),   # x row panel
                    pl.BlockSpec((H, H), lambda i: (0, 0)),    # resident weight
                    pl.BlockSpec((1, H), lambda i: (0, 0)),    # bias
                ],
                out_specs=pl.BlockSpec((tm, H), lambda i: (i, 0)),
            ),
            compiler_params=pltpu.CompilerParams(
                dimension_semantics=("parallel",),
                vmem_limit_bytes=vmem_limit),
            cost_estimate=cost,
        )(x, wt, b2)
    else:
        kernel = functools.partial(_resblock_kernel_streamed, tn=tn, tk=tk)
        out = pl.pallas_call(
            kernel,
            out_shape=jax.ShapeDtypeStruct((Mp, H), x.dtype),
            grid_spec=pltpu.PrefetchScalarGridSpec(
                num_scalar_prefetch=0,
                grid=(n_row_tiles, H // tn, H // tk),
                in_specs=[
                    pl.BlockSpec((tm, H), lambda i, j, k: (i, 0)),   # x row panel
                    pl.BlockSpec((tk, tn), lambda i, j, k: (k, j)),  # weight tile
                    pl.BlockSpec((1, tn), lambda i, j, k: (0, j)),   # bias row
                ],
                out_specs=pl.BlockSpec((tm, tn), lambda i, j, k: (i, j)),
                scratch_shapes=[pltpu.VMEM((tm, tn), jnp.float32)],
            ),
            compiler_params=pltpu.CompilerParams(
                dimension_semantics=("parallel", "parallel", "arbitrary"),
                vmem_limit_bytes=vmem_limit),
            cost_estimate=cost,
        )(x, wt, b2)

    return out[:M] if Mp != M else out


def resblock_ref(x, weight, bias):
    z = (x.astype(jnp.float32) @ weight.T.astype(jnp.float32)
         + bias.astype(jnp.float32))
    return (x.astype(jnp.float32) + z * jax.nn.sigmoid(z)).astype(x.dtype)


if __name__ == "__main__":
    key = jax.random.PRNGKey(0)
    k_x, k_w, k_b = jax.random.split(key, 3)

    # Small but non-trivial: M not a multiple of the row tile (padding path).
    batch, hidden = 40, 256
    x = jax.random.normal(k_x, (batch, hidden), dtype=jnp.float32)
    bound = 1.0 / (hidden ** 0.5)
    bias = jax.random.uniform(k_b, (hidden,), minval=-bound, maxval=bound,
                              dtype=jnp.float32)

    # (1) Random weight, default tiles -> weight-resident 1-D-grid path.
    weight = jax.random.normal(k_w, (hidden, hidden), dtype=jnp.float32) * bound
    wt, b2 = prepare_resblock_params(weight, bias)     # one-time, not per call
    out = jax.block_until_ready(resblock(x, wt, b2))
    ref = resblock_ref(x, weight, bias)
    assert out.shape == x.shape
    # Tolerance covers the explicit bf16 weight / bf16 MXU pass on f32 inputs.
    assert jnp.allclose(out, ref, atol=3e-2, rtol=3e-2), "mismatch (resident)"

    # (2) Same inputs, forced small tiles -> streamed 3-D-grid K-accum path.
    out_s = jax.block_until_ready(resblock(x, wt, b2, tm=16, tn=128, tk=128))
    assert jnp.allclose(out_s, ref, atol=3e-2, rtol=3e-2), "mismatch (streamed)"

    # (3) Module's actual init (zero weight, per ResBlock.__init__).
    weight0 = jnp.zeros((hidden, hidden), dtype=jnp.float32)
    wt0, _ = prepare_resblock_params(weight0, bias)
    out0 = jax.block_until_ready(resblock(x, wt0, b2))
    ref0 = resblock_ref(x, weight0, bias)
    assert jnp.allclose(out0, ref0, atol=1e-5, rtol=1e-5), "mismatch (zero weight)"

    print("KERNEL_OK")
</pallas_src>

<mosaic_0001>
module attributes {stable_mosaic.version = 11 : i64} {
  func.func @_resblock_kernel_resident(%arg0: i32, %arg1: memref<24x256xf32, #tpu.memory_space<vmem>>, %arg2: memref<256x256xbf16, #tpu.memory_space<vmem>>, %arg3: memref<1x256xf32, #tpu.memory_space<vmem>>, %arg4: memref<24x256xf32, #tpu.memory_space<vmem>>) attributes {dimension_semantics = [#tpu.dimension_semantics<parallel>], iteration_bounds = array<i64: 2>, scalar_prefetch = 0 : i64, scratch_operands = 0 : i64, tpu.core_type = #tpu.core_type<tc>, window_params = [{transform_indices = @transform_0, window_bounds = array<i64: 24, 256>}, {pipeline_mode = #tpu.pipeline_mode<synchronous>, transform_indices = @transform_1, window_bounds = array<i64: 256, 256>}, {pipeline_mode = #tpu.pipeline_mode<synchronous>, transform_indices = @transform_2, window_bounds = array<i64: 1, 256>}, {transform_indices = @transform_3, window_bounds = array<i64: 24, 256>}]} {
    %c0 = arith.constant 0 : index
    %c0_0 = arith.constant 0 : index
    %0 = vector.load %arg1[%c0, %c0_0] : memref<24x256xf32, #tpu.memory_space<vmem>>, vector<24x256xf32>
    %1 = arith.truncf %0 : vector<24x256xf32> to vector<24x256xbf16>
    %c0_1 = arith.constant 0 : index
    %c0_2 = arith.constant 0 : index
    %2 = vector.load %arg2[%c0_1, %c0_2] : memref<256x256xbf16, #tpu.memory_space<vmem>>, vector<256x256xbf16>
    %cst = arith.constant dense<0.000000e+00> : vector<24x256xf32>
    %3 = tpu.matmul %1, %2, %cst {dimension_numbers = #tpu.dot_dimension_numbers<[1], [0], [0], [1], [0, 0, 1, 1], [], []>} : vector<24x256xbf16>, vector<256x256xbf16>, vector<24x256xf32> -> vector<24x256xf32>
    %c0_3 = arith.constant 0 : index
    %c0_4 = arith.constant 0 : index
    %4 = vector.load %arg3[%c0_3, %c0_4] : memref<1x256xf32, #tpu.memory_space<vmem>>, vector<1x256xf32>
    %5 = vector.broadcast %4 : vector<1x256xf32> to vector<24x256xf32>
    %6 = arith.addf %3, %5 : vector<24x256xf32>
    %7 = arith.negf %6 : vector<24x256xf32>
    %8 = math.exp %7 : vector<24x256xf32>
    %cst_5 = arith.constant 1.000000e+00 : f32
    %9 = vector.broadcast %cst_5 : f32 to vector<24x256xf32>
    %10 = arith.addf %9, %8 : vector<24x256xf32>
    %11 = arith.divf %9, %10 : vector<24x256xf32>
    %12 = arith.mulf %6, %11 : vector<24x256xf32>
    %13 = arith.addf %0, %12 : vector<24x256xf32>
    %c0_6 = arith.constant 0 : index
    %c0_7 = arith.constant 0 : index
    %14 = vector.load %arg4[%c0_6, %c0_7] : memref<24x256xf32, #tpu.memory_space<vmem>>, vector<24x256xf32>
    tpu.vector_store %arg4[%c0_6, %c0_7], %13 {strides = array<i32>} : memref<24x256xf32, #tpu.memory_space<vmem>>, vector<24x256xf32>,
    return
  }
  func.func @transform_0(%arg0: i32) -> (i32, i32) {
    %c0_i32 = arith.constant 0 : i32
    %c0_i32_0 = arith.constant 0 : i32
    return %arg0, %c0_i32 : i32, i32
  }
  func.func @transform_1(%arg0: i32) -> (i32, i32) {
    %c0_i32 = arith.constant 0 : i32
    %c0_i32_0 = arith.constant 0 : i32
    %c0_i32_1 = arith.constant 0 : i32
    return %c0_i32, %c0_i32_0 : i32, i32
  }
  func.func @transform_2(%arg0: i32) -> (i32, i32) {
    %c0_i32 = arith.constant 0 : i32
    %c0_i32_0 = arith.constant 0 : i32
    %c0_i32_1 = arith.constant 0 : i32
    return %c0_i32, %c0_i32_0 : i32, i32
  }
  func.func @transform_3(%arg0: i32) -> (i32, i32) {
    %c0_i32 = arith.constant 0 : i32
    %c0_i32_0 = arith.constant 0 : i32
    return %arg0, %c0_i32 : i32, i32
  }
}

</mosaic_0001>

<llo_original>
// kernel: resblock.1
$region0: #{resblock.1}
  #allocation0 [shape = 'u32[]', space=smem, size = 0x4, offset = 0x4, fixed_abs, tag = 'smem constant byte address 0x4 - core index']
  #allocation1 [shape = 'u32[144,128]{1,0:T(1,128)}', space=vmem, size = 0x12000, scoped, tag = 'internal scratch']
  %s0 = inlined_call_operand.vmem [shape: f32[48,256], index: 0, kind: input, shape index: {}]
  %s1 = inlined_call_operand.hbm [shape: bf16[256,256], index: 1, kind: input, shape index: {}]
  %s2 = inlined_call_operand.vmem [shape: f32[1,256], index: 2, kind: input, shape index: {}]
  %s3 = inlined_call_operand.vmem [shape: f32[48,256], index: 3, kind: output, shape index: {}]
  %s4 = sld [smem:[#allocation0]]
  $region49: #{resblock.1} parent=0
    _
  %s6 = ssub.s32 1, %s4
  %s7 = scalar_select 0, %s6, %s4
  $region1: #{resblock.1} parent=0
    #allocation2 [shape = 'u8[131072]{0}', space=vmem, size = 0x20000, scoped, tag = 'input window, operand 1, single buffered']
    #allocation3 [shape = 's32[2]{0}', space=sflag, size = 0x8, scoped, tag = 'scoped memory for resblock.1']
    %8 = vsyncpa [#allocation3], 0
    loop: start=0, step=1, limit=4
    $region2: #{resblock.1} parent=1 // loop_pre_header
      _
    $region3: #{resblock.1} parent=1 // loop_header
      %s10 = sphi 0, %s14
      %p11 = scmp.ge.s32.totalorder %s10, 4
      %s20 = sphi 0, %s22
      %s23 = sphi 0, %s20
      %s24 = sphi 0, %s23
      %s40 = sphi 0, %s24
      %s44 = sphi 0, %s44
      %s46 = sphi 0, %s44
      %s47 = sphi 0, %s46
      %s61 = sphi 0, %s47
      %s65 = sphi 0, %s65
      %s67 = sphi 0, %s65
      %s68 = sphi 0, %s67
      %s82 = sphi 0, %s68
      %s88 = sphi 0, %s90
      %s91 = sphi 0, %s88
      %s92 = sphi 0, %s91
      %s108 = sphi 0, %s92
    $region4: #{resblock.1} parent=1 // loop_header_branch
      %13 = sbr.rel (%p11) target = $region8
    $region5: #{resblock.1} parent=1 // loop_body
      %s15 = ssub.s32 %s10, 1
      %s16 = ssub.s32 %s10, 2
      %s17 = sadd.s32 %s10, 1
      %s18 = ssub.s32 %s10, %s17
      %p19 = scmp.eq.s32.totalorder %s18, 0
      %s21 = sadd.s32 %s20, 1
      %s22 = scalar_select %p19, %s20, %s21
      %p25 = pneg %p19
      %p26 = scmp.eq.s32.totalorder %s10, 1
      %p27 = por %p25, %p26
      %p28 = scmp.ne.s32.totalorder %s20, %s23
      %p29 = scmp.eq.s32.totalorder %s10, 0
      %p30 = por %p28, %p29
      %p31 = scmp.ne.s32.totalorder %s20, %s23
      %p32 = scmp.eq.s32.totalorder %s15, 1
      %p33 = por %p31, %p32
      %p34 = scmp.ne.s32.totalorder %s23, %s24
      %p35 = scmp.eq.s32.totalorder %s15, 0
      %p36 = por %p34, %p35
      %p37 = scmp.ne.s32.totalorder %s23, %s24
      %p38 = scmp.eq.s32.totalorder %s16, 1
      %p39 = por %p37, %p38
      %p41 = scmp.ne.s32.totalorder %s24, %s40
      %p42 = scmp.eq.s32.totalorder %s16, 0
      %p43 = por %p41, %p42
      %s45 = sadd.s32 %s44, 1
      %p48 = scmp.eq.s32.totalorder %s10, 1
      %p49 = scmp.ne.s32.totalorder %s44, %s46
      %p50 = scmp.eq.s32.totalorder %s10, 0
      %p51 = por %p49, %p50
      %p52 = scmp.ne.s32.totalorder %s44, %s46
      %p53 = scmp.eq.s32.totalorder %s15, 1
      %p54 = por %p52, %p53
      %p55 = scmp.ne.s32.totalorder %s46, %s47
      %p56 = scmp.eq.s32.totalorder %s15, 0
      %p57 = por %p55, %p56
      %p58 = scmp.ne.s32.totalorder %s46, %s47
      %p59 = scmp.eq.s32.totalorder %s16, 1
      %p60 = por %p58, %p59
      %p62 = scmp.ne.s32.totalorder %s47, %s61
      %p63 = scmp.eq.s32.totalorder %s16, 0
      %p64 = por %p62, %p63
      %s66 = sadd.s32 %s65, 1
      %p69 = scmp.eq.s32.totalorder %s10, 1
      %p70 = scmp.ne.s32.totalorder %s65, %s67
      %p71 = scmp.eq.s32.totalorder %s10, 0
      %p72 = por %p70, %p71
      %p73 = scmp.ne.s32.totalorder %s65, %s67
      %p74 = scmp.eq.s32.totalorder %s15, 1
      %p75 = por %p73, %p74
      %p76 = scmp.ne.s32.totalorder %s67, %s68
      %p77 = scmp.eq.s32.totalorder %s15, 0
      %p78 = por %p76, %p77
      %p79 = scmp.ne.s32.totalorder %s67, %s68
      %p80 = scmp.eq.s32.totalorder %s16, 1
      %p81 = por %p79, %p80
      %p83 = scmp.ne.s32.totalorder %s68, %s82
      %p84 = scmp.eq.s32.totalorder %s16, 0
      %p85 = por %p83, %p84
      %s86 = ssub.s32 %s10, %s17
      %p87 = scmp.eq.s32.totalorder %s86, 0
      %s89 = sadd.s32 %s88, 1
      %s90 = scalar_select %p87, %s88, %s89
      %p93 = pneg %p87
      %p94 = scmp.eq.s32.totalorder %s10, 1
      %p95 = por %p93, %p94
      %p96 = scmp.ne.s32.totalorder %s88, %s91
      %p97 = scmp.eq.s32.totalorder %s10, 0
      %p98 = por %p96, %p97
      %p99 = scmp.ne.s32.totalorder %s88, %s91
      %p100 = scmp.eq.s32.totalorder %s15, 1
      %p101 = por %p99, %p100
      %p102 = scmp.ne.s32.totalorder %s91, %s92
      %p103 = scmp.eq.s32.totalorder %s15, 0
      %p104 = por %p102, %p103
      %p105 = scmp.ne.s32.totalorder %s91, %s92
      %p106 = scmp.eq.s32.totalorder %s16, 1
      %p107 = por %p105, %p106
      %p109 = scmp.ne.s32.totalorder %s92, %s108
      %p110 = scmp.eq.s32.totalorder %s16, 0
      %p111 = por %p109, %p110
      %p112 = scmp.le.s32.totalorder 1, %s10
      %p113 = scmp.lt.s32.totalorder %s10, 3
      %p114 = pnand %p112, %p113
      %p115 = pneg %p114
      // Predicated region
      $region9: #{resblock.1} parent=5 // pred_check
        _
      $region10: #{resblock.1} parent=5 // pred_check_branch
        %117 = sbr.rel (%p114) target = $region12
      $region11: #{resblock.1} parent=5 // pred_region
        %s118 = ssub.s32 %s10, 1
        // Predicated region
        $region13: #{resblock.1} parent=11 // pred_check
          %p119 = pneg %p57
        $region14: #{resblock.1} parent=11 // pred_check_branch
          %121 = sbr.rel (%p119) target = $region16
        $region15: #{resblock.1} parent=11 // pred_region
          %s123 = ssub.s32 4096, 4096
          %124 = vsyncadd [#allocation3], %s123
          %s125 = sshll.u32 [#allocation2], 4
          %s126 = int_to_ptr.vmem [resolvable:$true] %s125
          %131 = dma.hbm_to_vmem [thread:$0]  %s1, 4096, %s126, [#allocation3], 128, 128, 8
        $region16: #{resblock.1} parent=11 // pred_fallthru
          _
        // Predicated region
        $region17: #{resblock.1} parent=11 // pred_check
          %p132 = pneg %p78
        $region18: #{resblock.1} parent=11 // pred_check_branch
          %134 = sbr.rel (%p132) target = $region20
        $region19: #{resblock.1} parent=11 // pred_region
          _
        $region20: #{resblock.1} parent=11 // pred_fallthru
          _
      $region12: #{resblock.1} parent=5 // pred_fallthru
        _
      %p135 = scmp.lt.s32.totalorder %s10, 2
      // Predicated region
      $region21: #{resblock.1} parent=5 // pred_check
        %p136 = pneg %p135
      $region22: #{resblock.1} parent=5 // pred_check_branch
        %138 = sbr.rel (%p136) target = $region24
      $region23: #{resblock.1} parent=5 // pred_region
        // Predicated region
        $region25: #{resblock.1} parent=23 // pred_check
          %p139 = pneg %p30
        $region26: #{resblock.1} parent=23 // pred_check_branch
          %141 = sbr.rel (%p139) target = $region28
        $region27: #{resblock.1} parent=23 // pred_region
          %s142 = smul.u32 3, %s10
          %p143 = scmp.lt.s32.totalorder %s142, 5
          %s144 = scalar_select %p143, %s142, 5
          %s145 = smul.addr %s144, 2
          %s146 = smul.addr %s145, 8
          %s147 = scalar_lea.vmem %s0, %s146
          %s148 = smul.u32 3, %s10
        $region28: #{resblock.1} parent=23 // pred_fallthru
          _
      $region24: #{resblock.1} parent=5 // pred_fallthru
        _
      %p149 = scmp.le.s32.totalorder 1, %s10
      %p150 = scmp.lt.s32.totalorder %s10, 3
      %p151 = pnand %p149, %p150
      %p152 = pneg %p151
      // Predicated region
      $region29: #{resblock.1} parent=5 // pred_check
        _
      $region30: #{resblock.1} parent=5 // pred_check_branch
        %154 = sbr.rel (%p151) target = $region32
      $region31: #{resblock.1} parent=5 // pred_region
        %s155 = ssub.s32 %s10, 1
        // Predicated region
        $region33: #{resblock.1} parent=31 // pred_check
          %p156 = pneg %p57
        $region34: #{resblock.1} parent=31 // pred_check_branch
          %158 = sbr.rel (%p156) target = $region36
        $region35: #{resblock.1} parent=31 // pred_region
          %159 = dma.done [#allocation3], 4096
        $region36: #{resblock.1} parent=31 // pred_fallthru
          _
        %s160 = smul.u32 3, %s15
        %p161 = scmp.lt.s32.totalorder %s160, 5
        %s162 = scalar_select %p161, %s160, 5
        %s163 = smul.addr %s162, 2
        %s164 = smul.addr %s163, 8
        %s165 = scalar_lea.vmem %s0, %s164
        %p166 = pneg %p36
        %p167 = pneg %p33
        %p168 = pneg %p57
        %p169 = pneg %p54
        %p170 = pneg %p78
        %p171 = pneg %p75
        %p172 = pneg %p104
        %p173 = pneg %p101
        %s174 = smul.u32 3, %s15
        %p175 = scmp.lt.s32.totalorder %s174, 5
        %s176 = scalar_select %p175, %s174, 5
        %s177 = smul.addr %s176, 2
        %s178 = smul.addr %s177, 8
        %s179 = scalar_lea.vmem %s3, %s178
        %s180 = smul.u32 3, %s15
        %p181 = scmp.lt.s32.totalorder %s180, 5
        %s182 = scalar_select %p181, %s180, 5
        %s183 = smul.addr %s182, 2
        %s184 = smul.addr %s183, 8
        %s185 = scalar_lea.vmem %s0, %s184
        %s186 = smul.u32 3, %s15
        %s187 = smul.u32 3, %s15
        %p188 = scmp.lt.s32.totalorder %s187, 5
        %s189 = scalar_select %p188, %s187, 5
        %s190 = smul.addr %s189, 2
        %s191 = smul.addr %s190, 8
        %s192 = scalar_lea.vmem %s3, %s191
        %s193 = smul.u32 3, %s15
        %v194 = vld [vmem:[%s185] sm:$0xff]
        %v195 = vld [vmem:[%s185 + $0x8] sm:$0xff]
        %v196 = vld [vmem:[%s185 + $0x10] sm:$0xff]
        %v197 = vld [vmem:[%s185 + $0x18] sm:$0xff]
        %v198 = vld [vmem:[%s185 + $0x20] sm:$0xff]
        %v199 = vld [vmem:[%s185 + $0x28] sm:$0xff]
        %v200 = vpack.c.bf16 %v196, %v194
        %v201 = vpack.c.bf16 %v197, %v195
        %v202 = vpack.c.bf16 %v198, %v198
        %v203 = vpack.c.bf16 %v199, %v199
        %v204 = vld [vmem:[#allocation2] sm:$0xff]
        %v205 = vld [vmem:[#allocation2 + $0x8] sm:$0xff]
        %v206 = vld [vmem:[#allocation2 + $0x10] sm:$0xff]
        %v207 = vld [vmem:[#allocation2 + $0x18] sm:$0xff]
        %v208 = vld [vmem:[#allocation2 + $0x20] sm:$0xff]
        %v209 = vld [vmem:[#allocation2 + $0x28] sm:$0xff]
        %v210 = vld [vmem:[#allocation2 + $0x30] sm:$0xff]
        %v211 = vld [vmem:[#allocation2 + $0x38] sm:$0xff]
        %v212 = vld [vmem:[#allocation2 + $0x40] sm:$0xff]
        %v213 = vld [vmem:[#allocation2 + $0x48] sm:$0xff]
        %v214 = vld [vmem:[#allocation2 + $0x50] sm:$0xff]
        %v215 = vld [vmem:[#allocation2 + $0x58] sm:$0xff]
        %v216 = vld [vmem:[#allocation2 + $0x60] sm:$0xff]
        %v217 = vld [vmem:[#allocation2 + $0x68] sm:$0xff]
        %v218 = vld [vmem:[#allocation2 + $0x70] sm:$0xff]
        %v219 = vld [vmem:[#allocation2 + $0x78] sm:$0xff]
        %v220 = vld [vmem:[#allocation2 + $0x80] sm:$0xff]
        %v221 = vld [vmem:[#allocation2 + $0x88] sm:$0xff]
        %v222 = vld [vmem:[#allocation2 + $0x90] sm:$0xff]
        %v223 = vld [vmem:[#allocation2 + $0x98] sm:$0xff]
        %v224 = vld [vmem:[#allocation2 + $0xa0] sm:$0xff]
        %v225 = vld [vmem:[#allocation2 + $0xa8] sm:$0xff]
        %v226 = vld [vmem:[#allocation2 + $0xb0] sm:$0xff]
        %v227 = vld [vmem:[#allocation2 + $0xb8] sm:$0xff]
        %v228 = vld [vmem:[#allocation2 + $0xc0] sm:$0xff]
        %v229 = vld [vmem:[#allocation2 + $0xc8] sm:$0xff]
        %v230 = vld [vmem:[#allocation2 + $0xd0] sm:$0xff]
        %v231 = vld [vmem:[#allocation2 + $0xd8] sm:$0xff]
        %v232 = vld [vmem:[#allocation2 + $0xe0] sm:$0xff]
        %v233 = vld [vmem:[#allocation2 + $0xe8] sm:$0xff]
        %v234 = vld [vmem:[#allocation2 + $0xf0] sm:$0xff]
        %v235 = vld [vmem:[#allocation2 + $0xf8] sm:$0xff]
        %v236 = vld [vmem:[%s2] sm:$0x3]
        %v238 = vlaneseq
        %v239 = vshrl.u32 %v238, 7
        %v240 = vsub.s32 0, %v239
        %v241 = vrot.slane %v236, %v240
        %v242 = vlaneseq
        %v243 = vshrl.u32 %v242, 7
        %v244 = vsub.s32 1, %v243
        %v245 = vrot.slane %v236, %v244
        %v280 = vunpack.c.l.b16 %v204
        %v281 = vunpack.c.h.b16 %v204
        %v282 = vunpack.c.l.b16 %v205
        %v283 = vunpack.c.h.b16 %v205
        %v284 = vunpack.c.l.b16 %v206
        %v285 = vunpack.c.h.b16 %v206
        %v286 = vunpack.c.l.b16 %v207
        %v287 = vunpack.c.h.b16 %v207
        %v288 = vunpack.c.l.b16 %v208
        %v289 = vunpack.c.h.b16 %v208
        %v290 = vunpack.c.l.b16 %v209
        %v291 = vunpack.c.h.b16 %v209
        %v292 = vunpack.c.l.b16 %v210
        %v293 = vunpack.c.h.b16 %v210
        %v294 = vunpack.c.l.b16 %v211
        %v295 = vunpack.c.h.b16 %v211
        %v296 = vunpack.c.l.b16 %v212
        %v297 = vunpack.c.h.b16 %v212
        %v298 = vunpack.c.l.b16 %v213
        %v299 = vunpack.c.h.b16 %v213
        %v300 = vunpack.c.l.b16 %v214
        %v301 = vunpack.c.h.b16 %v214
        %v302 = vunpack.c.l.b16 %v215
        %v303 = vunpack.c.h.b16 %v215
        %v304 = vunpack.c.l.b16 %v216
        %v305 = vunpack.c.h.b16 %v216
        %v306 = vunpack.c.l.b16 %v217
        %v307 = vunpack.c.h.b16 %v217
        %v308 = vunpack.c.l.b16 %v218
        %v309 = vunpack.c.h.b16 %v218
        %v310 = vunpack.c.l.b16 %v219
        %v311 = vunpack.c.h.b16 %v219
        %v312 = vunpack.c.l.b16 %v220
        %v313 = vunpack.c.h.b16 %v220
        %v314 = vunpack.c.l.b16 %v221
        %v315 = vunpack.c.h.b16 %v221
        %v316 = vunpack.c.l.b16 %v222
        %v317 = vunpack.c.h.b16 %v222
        %v318 = vunpack.c.l.b16 %v223
        %v319 = vunpack.c.h.b16 %v223
        %v320 = vunpack.c.l.b16 %v224
        %v321 = vunpack.c.h.b16 %v224
        %v322 = vunpack.c.l.b16 %v225
        %v323 = vunpack.c.h.b16 %v225
        %v324 = vunpack.c.l.b16 %v226
        %v325 = vunpack.c.h.b16 %v226
        %v326 = vunpack.c.l.b16 %v227
        %v327 = vunpack.c.h.b16 %v227
        %v328 = vunpack.c.l.b16 %v228
        %v329 = vunpack.c.h.b16 %v228
        %v330 = vunpack.c.l.b16 %v229
        %v331 = vunpack.c.h.b16 %v229
        %v332 = vunpack.c.l.b16 %v230
        %v333 = vunpack.c.h.b16 %v230
        %v334 = vunpack.c.l.b16 %v231
        %v335 = vunpack.c.h.b16 %v231
        %v336 = vunpack.c.l.b16 %v232
        %v337 = vunpack.c.h.b16 %v232
        %v338 = vunpack.c.l.b16 %v233
        %v339 = vunpack.c.h.b16 %v233
        %v340 = vunpack.c.l.b16 %v234
        %v341 = vunpack.c.h.b16 %v234
        %v342 = vunpack.c.l.b16 %v235
        %v343 = vunpack.c.h.b16 %v235
        %v344 = vpack.c.b16 %v282, %v280
        %v345 = vpack.c.b16 %v283, %v281
        %v346 = vpack.c.b16 %v286, %v284
        %v347 = vpack.c.b16 %v287, %v285
        %v348 = vpack.c.b16 %v290, %v288
        %v349 = vpack.c.b16 %v291, %v289
        %v350 = vpack.c.b16 %v294, %v292
        %v351 = vpack.c.b16 %v295, %v293
        %v352 = vpack.c.b16 %v298, %v296
        %v353 = vpack.c.b16 %v299, %v297
        %v354 = vpack.c.b16 %v302, %v300
        %v355 = vpack.c.b16 %v303, %v301
        %v356 = vpack.c.b16 %v306, %v304
        %v357 = vpack.c.b16 %v307, %v305
        %v358 = vpack.c.b16 %v310, %v308
        %v359 = vpack.c.b16 %v311, %v309
        %v360 = vpack.c.b16 %v314, %v312
        %v361 = vpack.c.b16 %v315, %v313
        %v362 = vpack.c.b16 %v318, %v316
        %v363 = vpack.c.b16 %v319, %v317
        %v364 = vpack.c.b16 %v322, %v320
        %v365 = vpack.c.b16 %v323, %v321
        %v366 = vpack.c.b16 %v326, %v324
        %v367 = vpack.c.b16 %v327, %v325
        %v368 = vpack.c.b16 %v330, %v328
        %v369 = vpack.c.b16 %v331, %v329
        %v370 = vpack.c.b16 %v334, %v332
        %v371 = vpack.c.b16 %v335, %v333
        %v372 = vpack.c.b16 %v338, %v336
        %v373 = vpack.c.b16 %v339, %v337
        %v374 = vpack.c.b16 %v342, %v340
        %v375 = vpack.c.b16 %v343, %v341
        %408 = vmatprep.subr.bf16.mxu0 %v345
        %409 = vmatpush1.bf16.msra.mxu0 %v344
        %410 = vmatprep.subr.bf16.mxu0 %v347
        %411 = vmatpush1.bf16.msra.mxu0 %v346
        %412 = vmatprep.subr.bf16.mxu0 %v349
        %413 = vmatpush1.bf16.msra.mxu0 %v348
        %414 = vmatprep.subr.bf16.mxu0 %v351
        %415 = vmatpush1.bf16.msra.mxu0 %v350
        %416 = vmatprep.subr.bf16.mxu0 %v353
        %417 = vmatpush1.bf16.msra.mxu0 %v352
        %418 = vmatprep.subr.bf16.mxu0 %v355
        %419 = vmatpush1.bf16.msra.mxu0 %v354
        %420 = vmatprep.subr.bf16.mxu0 %v357
        %421 = vmatpush1.bf16.msra.mxu0 %v356
        %422 = vmatprep.subr.bf16.mxu0 %v359
        %423 = vmatpush1.bf16.msra.mxu0 %v358
        %424 = vmatprep.subr.bf16.mxu0 %v361
        %425 = vmatpush1.bf16.msra.mxu0 %v360
        %426 = vmatprep.subr.bf16.mxu0 %v363
        %427 = vmatpush1.bf16.msra.mxu0 %v362
        %428 = vmatprep.subr.bf16.mxu0 %v365
        %429 = vmatpush1.bf16.msra.mxu0 %v364
        %430 = vmatprep.subr.bf16.mxu0 %v367
        %431 = vmatpush1.bf16.msra.mxu0 %v366
        %432 = vmatprep.subr.bf16.mxu0 %v369
        %433 = vmatpush1.bf16.msra.mxu0 %v368
        %434 = vmatprep.subr.bf16.mxu0 %v371
        %435 = vmatpush1.bf16.msra.mxu0 %v370
        %436 = vmatprep.subr.bf16.mxu0 %v373
        %437 = vmatpush1.bf16.msra.mxu0 %v372
        %438 = vmatprep.subr.bf16.mxu0 %v375
        %439 = vmatpush1.bf16.msra.mxu0 %v374
        %440 = vmatprep.mubr.bf16.mxu0 %v201
        %441 = vmatmul.mubr.bf16.gmra.mrb[0].mxu0 %v200
        %v442 = vpop.f32.mrb[0].mxu0
        %v443 = vadd.f32 %v241, %v442
        %v444 = vpop.f32.mrb[0].mxu0
        %v445 = vadd.f32 %v245, %v444
        %v446 = vpop.f32.mrb[0].mxu0
        %v447 = vadd.f32 %v241, %v446
        %v448 = vpop.f32.mrb[0].mxu0
        %v449 = vadd.f32 %v245, %v448
        %450 = vmatprep.mubr.bf16.mxu0 %v203
        %451 = vmatmul.mubr.bf16.gmra.mrb[0].mxu0 %v202
        %v452 = vpop.f32.mrb[0].mxu0
        %v453 = vadd.f32 %v241, %v452
        %v454 = vpop.f32.mrb[0].mxu0
        %v455 = vadd.f32 %v245, %v454
        %v456 = vpop.f32.mrb[0].mxu0
        %v457 = vpop.f32.mrb[0].mxu0
        %458 = vdwg.mxu0
        %v459 = vxor.u32 %v443, 2147483648
        %v460 = vxor.u32 %v445, 2147483648
        %v461 = vxor.u32 %v447, 2147483648
        %v462 = vxor.u32 %v449, 2147483648
        %v463 = vxor.u32 %v453, 2147483648
        %v464 = vxor.u32 %v455, 2147483648
        %v465 = vmul.f32 %v459, 1.442695
        %v466 = vpow.pop %v465
        %v467 = vmul.f32 %v460, 1.442695
        %v468 = vpow.pop %v467
        %v469 = vmul.f32 %v461, 1.442695
        %v470 = vpow.pop %v469
        %v471 = vmul.f32 %v462, 1.442695
        %v472 = vpow.pop %v471
        %v473 = vmul.f32 %v463, 1.442695
        %v474 = vpow.pop %v473
        %v475 = vmul.f32 %v464, 1.442695
        %v476 = vpow.pop %v475
        %v477 = vadd.f32 %v466, 1.0
        %v478 = vadd.f32 %v468, 1.0
        %v479 = vadd.f32 %v470, 1.0
        %v480 = vadd.f32 %v472, 1.0
        %v481 = vadd.f32 %v474, 1.0
        %v482 = vadd.f32 %v476, 1.0
        %v483 = vrcp.pop %v477
        %v484 = vmul.f32 1.0, %v483
        %v485 = vrcp.pop %v478
        %v486 = vmul.f32 1.0, %v485
        %v487 = vrcp.pop %v479
        %v488 = vmul.f32 1.0, %v487
        %v489 = vrcp.pop %v480
        %v490 = vmul.f32 1.0, %v489
        %v491 = vrcp.pop %v481
        %v492 = vmul.f32 1.0, %v491
        %v493 = vrcp.pop %v482
        %v494 = vmul.f32 1.0, %v493
        %v495 = vmul.f32 %v443, %v484
        %v496 = vmul.f32 %v445, %v486
        %v497 = vmul.f32 %v447, %v488
        %v498 = vmul.f32 %v449, %v490
        %v499 = vmul.f32 %v453, %v492
        %v500 = vmul.f32 %v455, %v494
        %v501 = vadd.f32 %v194, %v495
        %v502 = vadd.f32 %v195, %v496
        %v503 = vadd.f32 %v196, %v497
        %v504 = vadd.f32 %v197, %v498
        %v505 = vadd.f32 %v198, %v499
        %v506 = vadd.f32 %v199, %v500
        %507 = vst [vmem:[%s192] sm:$0xff] %v501
        %508 = vst [vmem:[%s192 + $0x8] sm:$0xff] %v502
        %509 = vst [vmem:[%s192 + $0x10] sm:$0xff] %v503
        %510 = vst [vmem:[%s192 + $0x18] sm:$0xff] %v504
        %511 = vst [vmem:[%s192 + $0x20] sm:$0xff] %v505
        %512 = vst [vmem:[%s192 + $0x28] sm:$0xff] %v506
        %s513 = smul.u32 3, %s15
        %p514 = scmp.lt.s32.totalorder %s513, 5
        %s515 = scalar_select %p514, %s513, 5
        %s516 = smul.addr %s515, 2
        %s517 = smul.addr %s516, 8
        %s518 = scalar_lea.vmem %s3, %s517
        // Predicated region
        $region37: #{resblock.1} parent=31 // pred_check
          %p519 = pneg %p101
        $region38: #{resblock.1} parent=31 // pred_check_branch
          %521 = sbr.rel (%p519) target = $region40
        $region39: #{resblock.1} parent=31 // pred_region
          %s522 = smul.u32 3, %s15
        $region40: #{resblock.1} parent=31 // pred_fallthru
          _
      $region32: #{resblock.1} parent=5 // pred_fallthru
        _
      %p523 = scmp.le.s32.totalorder 2, %s10
      // Predicated region
      $region41: #{resblock.1} parent=5 // pred_check
        %p524 = pneg %p523
      $region42: #{resblock.1} parent=5 // pred_check_branch
        %526 = sbr.rel (%p524) target = $region44
      $region43: #{resblock.1} parent=5 // pred_region
        %s527 = ssub.s32 %s10, 2
        // Predicated region
        $region45: #{resblock.1} parent=43 // pred_check
          %p528 = pneg %p107
        $region46: #{resblock.1} parent=43 // pred_check_branch
          %530 = sbr.rel (%p528) target = $region48
        $region47: #{resblock.1} parent=43 // pred_region
          %s531 = smul.u32 3, %s16
          %p532 = scmp.lt.s32.totalorder %s531, 5
          %s533 = scalar_select %p532, %s531, 5
          %s534 = smul.addr %s533, 2
          %s535 = smul.addr %s534, 8
          %s536 = scalar_lea.vmem %s3, %s535
        $region48: #{resblock.1} parent=43 // pred_fallthru
          _
      $region44: #{resblock.1} parent=5 // pred_fallthru
        _
    $region6: #{resblock.1} parent=1 // loop_footer
      %s14 = sadd.s32 1, %s10
    $region7: #{resblock.1} parent=1 // loop_footer_branch
      %9 = sbr.rel target = $region3
    $region8: #{resblock.1} parent=1 // loop_exit
      _
    %537 = vsyncpa [#allocation3], 1
    %s538 = scalar_lea.sflag [#allocation3], 1
    %539 = vsyncpa %s538, 1

</llo_original>
